<compile_context>
chip_gen: v6e
topology: v6e:2x2x1
jax: 0.10.0
libtpu: 0.0.40
codegen_flags: <defaults>
</compile_context>

<pallas_src>
import functools

import jax
import jax.numpy as jnp
from jax import lax
from jax.experimental import pallas as pl
from jax.experimental.pallas import tpu as pltpu


def _cdiv(a: int, b: int) -> int:
    return (a + b - 1) // b


def _brier_kernel(x_ref, t_ref, out_ref, acc_ref, *,
                  batch: int, tile_b: int, tiles_per_split: int,
                  num_tiles: int, ragged: bool):
    # x_ref  : (tile_b, C) logits tile, native dtype (upcast to f32 below)
    # t_ref  : (tile_b, 1) int32 labels tile
    # out_ref: (1, 1)      f32 per-core partial sum
    # acc_ref: (tile_b, C) f32 elementwise accumulator (VPU adds per tile,
    #          one cross-lane reduction at finalize)
    c = pl.program_id(0)          # "parallel" axis: megacore split on v7x
    i = pl.program_id(1)          # "arbitrary" axis: reduction over batch tiles

    @pl.when(i == 0)
    def _init():
        acc_ref[...] = jnp.zeros_like(acc_ref)

    x = x_ref[...].astype(jnp.float32)    # upcast AFTER the (possibly bf16) load
    t = t_ref[...]                        # (tile_b, 1) int32

    def squared_diff(xv):
        # softmax over classes (last axis == PyTorch dim=1)
        m = jnp.max(xv, axis=-1, keepdims=True)
        e = jnp.exp(xv - m)
        inv_s = pl.reciprocal(jnp.sum(e, axis=-1, keepdims=True), approx=True)
        p = e * inv_s
        # one-hot(target) via iota compare (replaces scatter_)
        cls = lax.broadcasted_iota(jnp.int32, xv.shape, 1)
        one_hot = (t == cls).astype(jnp.float32)
        d = one_hot - p
        return d * d

    g = c * tiles_per_split + i           # global batch-tile index

    if ragged:
        is_ragged_tile = g == (num_tiles - 1)

        @pl.when(jnp.logical_not(is_ragged_tile))
        def _full_tile():
            acc_ref[...] += squared_diff(x)

        @pl.when(is_ragged_tile)
        def _partial_tile():
            # Mask out-of-range rows. Sanitize logits BEFORE exp so garbage in
            # the padded region can never produce inf/NaN.
            row = g * tile_b + lax.broadcasted_iota(jnp.int32, (tile_b, 1), 0)
            valid = row < batch
            xs = jnp.where(valid, x, 0.0)
            acc_ref[...] += jnp.where(valid, squared_diff(xs), 0.0)
    else:
        acc_ref[...] += squared_diff(x)

    @pl.when(i == pl.num_programs(1) - 1)
    def _finalize():
        out_ref[...] = jnp.sum(acc_ref[...], keepdims=True)   # (1, 1)


def _pick_tile_b(batch: int, classes: int, itemsize: int) -> int:
    # Budget ~24 MiB live VMEM: 2x-buffered input rows + f32 accumulator rows.
    budget = 24 * 1024 * 1024
    per_row = classes * (2 * itemsize + 4) + 8
    if batch <= 2048 and batch * per_row <= budget:
        return batch                       # single block over the whole batch
    tb = min(2048, budget // per_row, batch)
    tb = max(16, (tb // 16) * 16)          # sublane multiple (f32 and bf16 safe)
    return int(tb)


def brier_score(logits, target):
    """logits: (batch, classes) float (f32 or bf16); target: (batch,) int labels."""
    B, C = logits.shape
    target = jnp.asarray(target, jnp.int32).reshape(B, 1)

    tb = _pick_tile_b(B, C, jnp.dtype(logits.dtype).itemsize)
    num_tiles = _cdiv(B, tb)
    ragged = (B % tb) != 0
    # Split the batch-tile loop across the 2 TensorCores of a v7x chip
    # (single-core v5e/v6e just run the parallel axis serially).
    n_splits = 2 if (num_tiles >= 2 and num_tiles % 2 == 0) else 1
    tiles_per_split = num_tiles // n_splits

    kernel = functools.partial(
        _brier_kernel, batch=B, tile_b=tb, tiles_per_split=tiles_per_split,
        num_tiles=num_tiles, ragged=ragged)

    partials = pl.pallas_call(
        kernel,
        out_shape=jax.ShapeDtypeStruct((n_splits, 1), jnp.float32),
        grid_spec=pltpu.PrefetchScalarGridSpec(
            num_scalar_prefetch=0,
            grid=(n_splits, tiles_per_split),
            in_specs=[
                pl.BlockSpec((tb, C), lambda c, i: (c * tiles_per_split + i, 0)),
                pl.BlockSpec((tb, 1), lambda c, i: (c * tiles_per_split + i, 0)),
            ],
            out_specs=pl.BlockSpec((1, 1), lambda c, i: (c, 0)),
            scratch_shapes=[pltpu.VMEM((tb, C), jnp.float32)],
        ),
        compiler_params=pltpu.CompilerParams(
            dimension_semantics=("parallel", "arbitrary")),
    )(logits, target)

    return jnp.sum(partials) / float(B)


def _brier_reference(logits, target):
    """Pure-JAX reference mirroring the PyTorch forward."""
    p = jax.nn.softmax(jnp.asarray(logits, jnp.float32), axis=1)
    one_hot = jax.nn.one_hot(target, logits.shape[1], dtype=jnp.float32)
    return jnp.sum((one_hot - p) ** 2) / float(logits.shape[0])


if __name__ == "__main__":
    key = jax.random.PRNGKey(0)
    k1, k2 = jax.random.split(key)
    batch, classes = 8, 4
    logits = jax.random.normal(k1, (batch, classes), dtype=jnp.float32)
    target = jax.random.randint(k2, (batch,), 0, classes, dtype=jnp.int32)

    loss = jax.block_until_ready(brier_score(logits, target))
    ref = jax.block_until_ready(_brier_reference(logits, target))
    # pl.reciprocal(approx=True) perturbs softmax at ~1e-3 relative level;
    # use a tolerance appropriate for the approximate EUP reciprocal.
    assert jnp.allclose(loss, ref, atol=2e-3, rtol=2e-3), (loss, ref)
    print("KERNEL_OK")
</pallas_src>

<mosaic_0001>
module attributes {stable_mosaic.version = 11 : i64} {
  func.func @_brier_kernel(%arg0: i32, %arg1: i32, %arg2: memref<8x4xf32, #tpu.memory_space<vmem>>, %arg3: memref<8x1xi32, #tpu.memory_space<vmem>>, %arg4: memref<1x1xf32, #tpu.memory_space<vmem>>, %arg5: memref<8x4xf32, #tpu.memory_space<vmem>>) attributes {dimension_semantics = [#tpu.dimension_semantics<parallel>, #tpu.dimension_semantics<arbitrary>], iteration_bounds = array<i64: 1, 1>, scalar_prefetch = 0 : i64, scratch_operands = 1 : i64, tpu.core_type = #tpu.core_type<tc>, window_params = [{transform_indices = @transform_0, window_bounds = array<i64: 8, 4>}, {transform_indices = @transform_1, window_bounds = array<i64: 8, 1>}, {transform_indices = @transform_2, window_bounds = array<i64: 1, 1>}]} {
    %c0_i32 = arith.constant 0 : i32
    %0 = arith.cmpi eq, %arg1, %c0_i32 : i32
    %1 = arith.extui %0 : i1 to i32
    %c0_i32_0 = arith.constant 0 : i32
    %2 = arith.cmpi ne, %1, %c0_i32_0 : i32
    scf.if %2 {
      %cst_11 = arith.constant 0.000000e+00 : f32
      %28 = vector.broadcast %cst_11 : f32 to vector<8x4xf32>
      %c0_12 = arith.constant 0 : index
      %c0_13 = arith.constant 0 : index
      %29 = vector.load %arg5[%c0_12, %c0_13] : memref<8x4xf32, #tpu.memory_space<vmem>>, vector<8x4xf32>
      tpu.vector_store %arg5[%c0_12, %c0_13], %28 {strides = array<i32>} : memref<8x4xf32, #tpu.memory_space<vmem>>, vector<8x4xf32>,
    } else {
    }
    %c0 = arith.constant 0 : index
    %c0_1 = arith.constant 0 : index
    %3 = vector.load %arg2[%c0, %c0_1] : memref<8x4xf32, #tpu.memory_space<vmem>>, vector<8x4xf32>
    %c0_2 = arith.constant 0 : index
    %c0_3 = arith.constant 0 : index
    %4 = vector.load %arg3[%c0_2, %c0_3] : memref<8x1xi32, #tpu.memory_space<vmem>>, vector<8x1xi32>
    %c0_4 = arith.constant 0 : index
    %c0_5 = arith.constant 0 : index
    %5 = vector.load %arg5[%c0_4, %c0_5] : memref<8x4xf32, #tpu.memory_space<vmem>>, vector<8x4xf32>
    %cst = arith.constant dense<0xFF800000> : vector<8xf32>
    %6 = vector.multi_reduction <maximumf>, %3, %cst [1] : vector<8x4xf32> to vector<8xf32>
    %7 = vector.shape_cast %6 : vector<8xf32> to vector<8x1xf32>
    %8 = vector.broadcast %7 : vector<8x1xf32> to vector<8x4xf32>
    %9 = arith.subf %3, %8 : vector<8x4xf32>
    %10 = math.exp %9 : vector<8x4xf32>
    %cst_6 = arith.constant dense<0.000000e+00> : vector<8xf32>
    %11 = vector.multi_reduction <add>, %10, %cst_6 [1] : vector<8x4xf32> to vector<8xf32>
    %12 = vector.shape_cast %11 : vector<8xf32> to vector<8x1xf32>
    %13 = tpu.reciprocal %12 {approx = true} : vector<8x1xf32> -> vector<8x1xf32>
    %14 = vector.broadcast %13 : vector<8x1xf32> to vector<8x4xf32>
    %15 = arith.mulf %10, %14 : vector<8x4xf32>
    %16 = tpu.iota {dimensions = array<i32: 1>} : vector<8x4xi32>
    %17 = vector.broadcast %4 : vector<8x1xi32> to vector<8x4xi32>
    %18 = arith.cmpi eq, %17, %16 : vector<8x4xi32>
    %19 = arith.extui %18 : vector<8x4xi1> to vector<8x4xi32>
    %20 = arith.sitofp %19 : vector<8x4xi32> to vector<8x4xf32>
    %21 = arith.subf %20, %15 : vector<8x4xf32>
    %22 = arith.mulf %21, %21 : vector<8x4xf32>
    %23 = arith.addf %5, %22 : vector<8x4xf32>
    %c0_7 = arith.constant 0 : index
    %c0_8 = arith.constant 0 : index
    %24 = vector.load %arg5[%c0_7, %c0_8] : memref<8x4xf32, #tpu.memory_space<vmem>>, vector<8x4xf32>
    tpu.vector_store %arg5[%c0_7, %c0_8], %23 {strides = array<i32>} : memref<8x4xf32, #tpu.memory_space<vmem>>, vector<8x4xf32>,
    %c0_i32_9 = arith.constant 0 : i32
    %25 = arith.cmpi eq, %arg1, %c0_i32_9 : i32
    %26 = arith.extui %25 : i1 to i32
    %c0_i32_10 = arith.constant 0 : i32
    %27 = arith.cmpi ne, %26, %c0_i32_10 : i32
    scf.if %27 {
      %c0_11 = arith.constant 0 : index
      %c0_12 = arith.constant 0 : index
      %28 = vector.load %arg5[%c0_11, %c0_12] : memref<8x4xf32, #tpu.memory_space<vmem>>, vector<8x4xf32>
      %29 = vector.shape_cast %28 : vector<8x4xf32> to vector<1x8x4xf32>
      %cst_13 = arith.constant dense<0.000000e+00> : vector<1xf32>
      %30 = vector.multi_reduction <add>, %29, %cst_13 [1, 2] : vector<1x8x4xf32> to vector<1xf32>
      %31 = vector.shape_cast %30 : vector<1xf32> to vector<1x1x1xf32>
      %32 = vector.extract %31[0, 0, 0] : f32 from vector<1x1x1xf32>
      %33 = vector.broadcast %32 : f32 to vector<1x1xf32>
      %c0_14 = arith.constant 0 : index
      %c0_15 = arith.constant 0 : index
      %34 = vector.load %arg4[%c0_14, %c0_15] : memref<1x1xf32, #tpu.memory_space<vmem>>, vector<1x1xf32>
      tpu.vector_store %arg4[%c0_14, %c0_15], %33 {strides = array<i32>} : memref<1x1xf32, #tpu.memory_space<vmem>>, vector<1x1xf32>,
    } else {
    }
    return
  }
  func.func @transform_0(%arg0: i32, %arg1: i32) -> (i32, i32) {
    %c1_i32 = arith.constant 1 : i32
    %0 = arith.muli %arg0, %c1_i32 : i32
    %1 = arith.addi %0, %arg1 : i32
    %c0_i32 = arith.constant 0 : i32
    %c0_i32_0 = arith.constant 0 : i32
    return %1, %c0_i32 : i32, i32
  }
  func.func @transform_1(%arg0: i32, %arg1: i32) -> (i32, i32) {
    %c1_i32 = arith.constant 1 : i32
    %0 = arith.muli %arg0, %c1_i32 : i32
    %1 = arith.addi %0, %arg1 : i32
    %c0_i32 = arith.constant 0 : i32
    %c0_i32_0 = arith.constant 0 : i32
    return %1, %c0_i32 : i32, i32
  }
  func.func @transform_2(%arg0: i32, %arg1: i32) -> (i32, i32) {
    %c0_i32 = arith.constant 0 : i32
    %c0_i32_0 = arith.constant 0 : i32
    return %arg0, %c0_i32 : i32, i32
  }
}

</mosaic_0001>

<llo_original>
// kernel: tpu_custom_call.1
$region0: #{tpu_custom_call.1}
  #allocation0 [shape = 'u32[]', space=smem, size = 0x4, offset = 0x4, fixed_abs, tag = 'smem constant byte address 0x4 - core index']
  #allocation1 [shape = 'u32[144,128]{1,0:T(1,128)}', space=vmem, size = 0x12000, scoped, tag = 'internal scratch']
  #allocation2 [shape = 'f32[8,4]{1,0:T(8,128)}', space=vmem, size = 0x1000, scoped, tag = 'scratch operand']
  %s0 = inlined_call_operand.vmem [shape: f32[8,4], index: 0, kind: input, shape index: {}]
  %s1 = inlined_call_operand.vmem [shape: s32[8,1], index: 1, kind: input, shape index: {}]
  %s2 = inlined_call_operand.hbm [shape: f32[1,1], index: 2, kind: output, shape index: {}]
  %s3 = sld [smem:[#allocation0]]
  $region26: #{tpu_custom_call.1} parent=0
    _
  %s5 = ssub.s32 1, %s3
  %s6 = scalar_select 0, %s5, %s3
  $region1: #{tpu_custom_call.1} parent=0
    #allocation3 [shape = 'u8[512]{0}', space=vmem, size = 0x400, scoped, tag = 'output window, operand 0, single buffered']
    #allocation4 [shape = 's32[1]{0}', space=sflag, size = 0x4, scoped, tag = 'scoped memory for tpu_custom_call.1']
    %7 = vsyncpa [#allocation4], 0
    // Predicated region
    $region2: #{tpu_custom_call.1} parent=1 // pred_check
      _
    $region3: #{tpu_custom_call.1} parent=1 // pred_check_branch
      %9 = sbr.rel (0) target = $region5
    $region4: #{tpu_custom_call.1} parent=1 // pred_region
      %s10 = sadd.s32 0, 0
      %p11 = scmp.lt.s32.totalorder %s10, 0
      %s12 = scalar_select %p11, %s10, 0
      %s13 = smul.addr %s12, 8
      %s14 = scalar_lea.vmem %s0, %s13
      %s15 = sadd.s32 0, 0
    $region5: #{tpu_custom_call.1} parent=1 // pred_fallthru
      _
    // Predicated region
    $region6: #{tpu_custom_call.1} parent=1 // pred_check
      _
    $region7: #{tpu_custom_call.1} parent=1 // pred_check_branch
      %17 = sbr.rel (0) target = $region9
    $region8: #{tpu_custom_call.1} parent=1 // pred_region
      %s18 = sadd.s32 0, 0
      %p19 = scmp.lt.s32.totalorder %s18, 0
      %s20 = scalar_select %p19, %s18, 0
      %s21 = smul.addr %s20, 8
      %s22 = scalar_lea.vmem %s1, %s21
      %s23 = sadd.s32 0, 0
    $region9: #{tpu_custom_call.1} parent=1 // pred_fallthru
      _
    %s24 = sadd.s32 0, 0
    %p25 = scmp.lt.s32.totalorder %s24, 0
    %s26 = scalar_select %p25, %s24, 0
    %s27 = smul.addr %s26, 8
    %s28 = scalar_lea.vmem %s0, %s27
    %s29 = sadd.s32 0, 0
    %p30 = scmp.lt.s32.totalorder %s29, 0
    %s31 = scalar_select %p30, %s29, 0
    %s32 = smul.addr %s31, 8
    %s33 = scalar_lea.vmem %s1, %s32
    %s34 = sadd.s32 0, 0
    %p35 = scmp.lt.s32.totalorder %s34, 0
    %s36 = scalar_select %p35, %s34, 0
    %s37 = smul.addr %s36, 8
    %s38 = scalar_lea.vmem %s0, %s37
    %s39 = sadd.s32 0, 0
    %s40 = sadd.s32 0, 0
    %p41 = scmp.lt.s32.totalorder %s40, 0
    %s42 = scalar_select %p41, %s40, 0
    %s43 = smul.addr %s42, 8
    %s44 = scalar_lea.vmem %s1, %s43
    %s45 = sadd.s32 0, 0
    %p46 = scmp.eq.s32.totalorder 0, 0
    // Predicated region
    $region10: #{tpu_custom_call.1} parent=1 // pred_check
      %p47 = pneg %p46
    $region11: #{tpu_custom_call.1} parent=1 // pred_check_branch
      %49 = sbr.rel (%p47) target = $region13
    $region12: #{tpu_custom_call.1} parent=1 // pred_region
      %vm50 = vcmask 31744
      %51 = vst.msk [vmem:[#allocation2] sm:$0xff] %vm50, 0.0
    $region13: #{tpu_custom_call.1} parent=1 // pred_fallthru
      _
    %v52 = vld [vmem:[%s38] sm:$0xff]
    %v53 = vld [vmem:[%s44] sm:$0xff]
    %v54 = vld [vmem:[#allocation2] sm:$0xff]
    %vm55 = vcmask 31744
    %v56 = vsel %vm55, %v52, -inf
    %57 = vmax.xlane.f32.xlu0 %v56
    %v58 = vpop.xlane.xlu0 %57
    %v59 = vsub.f32 %v52, %v58
    %v60 = vmul.f32 %v59, 1.442695
    %v61 = vpow.pop %v60
    %v62 = vsel %vm55, %v61, 0.0
    %63 = vadd.xlane.f32.xlu0 %v62
    %v64 = vpop.xlane.xlu0 %63
    %v65 = vrcp.pop %v64
    %v66 = vmul.f32 %v61, %v65
    %v67 = vlaneseq
    %v68 = vand.u32 %v67, 127
    %69 = vset.pattern.permute.xlu0 0
    %70 = vperm.xlu0 %69, %v53
    %v71 = vpop.permute.xlu0 %70
    %vm72 = vcmp.eq.s32.totalorder %v71, %v68
    %v73 = vsel %vm72, 1, 0
    %v74 = vcvt.s32.f32 %v73
    %v75 = vsub.f32 %v74, %v66
    %v76 = vmul.f32 %v75, %v75
    %v77 = vadd.f32 %v54, %v76
    %78 = vst.msk [vmem:[#allocation2] sm:$0xff] %vm55, %v77
    // Predicated region
    $region14: #{tpu_custom_call.1} parent=1 // pred_check
      %p79 = pneg %p46
    $region15: #{tpu_custom_call.1} parent=1 // pred_check_branch
      %81 = sbr.rel (%p79) target = $region17
    $region16: #{tpu_custom_call.1} parent=1 // pred_region
      %v82 = vld [vmem:[#allocation2] sm:$0xff]
      %v83 = vsel %vm55, %v82, 0.0
      %84 = vadd.xlane.f32.xlu0 %v83
      %v85 = vpop.xlane.xlu0 %84
      %v86 = vrot.slane %v85, 4
      %v87 = vadd.f32 %v85, %v86
      %v88 = vrot.slane %v87, 2
      %v89 = vadd.f32 %v87, %v88
      %v90 = vrot.slane %v89, 1
      %v91 = vadd.f32 %v89, %v90
      %s92 = vtos %v91
      %v93 = vstv %s92
      %vm94 = vcmask 0
      %95 = vst.msk [vmem:[#allocation3] sm:$0x1] %vm94, %v93
    $region17: #{tpu_custom_call.1} parent=1 // pred_fallthru
      _
    // Predicated region
    $region18: #{tpu_custom_call.1} parent=1 // pred_check
      _
    $region19: #{tpu_custom_call.1} parent=1 // pred_check_branch
      %97 = sbr.rel (0) target = $region21
    $region20: #{tpu_custom_call.1} parent=1 // pred_region
      %s99 = ssub.s32 16, 16
      %100 = vsyncadd [#allocation4], %s99
      %s102 = sshll.u32 [#allocation3], 4
      %s103 = int_to_ptr.vmem [resolvable:$true] %s102
      %105 = dma.vmem_to_hbm [thread:$0]  %s103, 16, %s2, [#allocation4]
    $region21: #{tpu_custom_call.1} parent=1 // pred_fallthru
      _
    // Predicated region
    $region22: #{tpu_custom_call.1} parent=1 // pred_check
      _
    $region23: #{tpu_custom_call.1} parent=1 // pred_check_branch
      %107 = sbr.rel (0) target = $region25
    $region24: #{tpu_custom_call.1} parent=1 // pred_region
      %108 = dma.done [#allocation4], 16
    $region25: #{tpu_custom_call.1} parent=1 // pred_fallthru
      _
    %109 = vsyncpa [#allocation4], 1

</llo_original>
